<compile_context>
chip_gen: v7x
topology: tpu7x:2x2x1
jax: 0.10.0
libtpu: 0.0.40
codegen_flags: <defaults>
</compile_context>

<pallas_src>
import jax
import jax.numpy as jnp
from jax.experimental import pallas as pl
from jax.experimental.pallas import tpu as pltpu  # noqa: F401  (TPU backend lowering)

_LANES = 128


def _tanh_relu_dup_kernel(x_ref, o_ref):
    # Single input stream; compute relu(tanh(.)) once.
    v = jnp.maximum(jnp.tanh(x_ref[...]), 0.0)        # (1, n_pad)
    # One full-tile, lane-dense store covering both output rows.
    o_ref[...] = jnp.broadcast_to(v, o_ref.shape)      # (2, n_pad)


def model_forward(x):
    """x: float32 array of shape (2, 3, 4) (any shape with even numel works)."""
    n = x.size
    flat = x.reshape(1, n)                             # x.view(1, -1) (glue only)

    # Lane-dense presentation: pad the last dim up to a multiple of 128.
    n_pad = max(_LANES, pl.cdiv(n, _LANES) * _LANES)
    if n_pad != n:
        flat = jnp.pad(flat, ((0, 0), (0, n_pad - n)))  # zeros: tanh/relu keep them 0

    out_pad = pl.pallas_call(
        _tanh_relu_dup_kernel,
        out_shape=jax.ShapeDtypeStruct((2, n_pad), x.dtype),
    )(flat)

    # Strip the lane padding; result is the (2, n) "cat" buffer after tanh+relu.
    return out_pad[:, :n]


if __name__ == "__main__":
    key = jax.random.PRNGKey(0)
    x = jax.random.normal(key, (2, 3, 4), dtype=jnp.float32)

    out = model_forward(x)
    out = jax.block_until_ready(out)

    # Pure-JAX reference of the same (well-defined) semantics.
    ref = jnp.maximum(
        jnp.tanh(jnp.concatenate([x.reshape(1, -1), x.reshape(1, -1)], axis=0)), 0.0
    )
    assert out.shape == (2, x.size)
    assert jnp.allclose(out, ref, atol=1e-6), "mismatch vs reference"

    print("KERNEL_OK")
</pallas_src>

<mosaic_0001>
module attributes {stable_mosaic.version = 11 : i64} {
  func.func @_tanh_relu_dup_kernel(%arg0: memref<1x128xf32, #tpu.memory_space<vmem>>, %arg1: memref<2x128xf32, #tpu.memory_space<vmem>>) attributes {dimension_semantics = [], scalar_prefetch = 0 : i64, scratch_operands = 0 : i64, tpu.core_type = #tpu.core_type<tc>} {
    %c0 = arith.constant 0 : index
    %c0_0 = arith.constant 0 : index
    %0 = vector.load %arg0[%c0, %c0_0] : memref<1x128xf32, #tpu.memory_space<vmem>>, vector<1x128xf32>
    %1 = math.tanh %0 : vector<1x128xf32>
    %cst = arith.constant 0.000000e+00 : f32
    %2 = vector.broadcast %cst : f32 to vector<1x128xf32>
    %3 = arith.maximumf %1, %2 : vector<1x128xf32>
    %4 = vector.shape_cast %3 : vector<1x128xf32> to vector<1x128xf32>
    %5 = vector.broadcast %4 : vector<1x128xf32> to vector<2x128xf32>
    %c0_1 = arith.constant 0 : index
    %c0_2 = arith.constant 0 : index
    %6 = vector.load %arg1[%c0_1, %c0_2] : memref<2x128xf32, #tpu.memory_space<vmem>>, vector<2x128xf32>
    tpu.vector_store %arg1[%c0_1, %c0_2], %5 {strides = array<i32>} : memref<2x128xf32, #tpu.memory_space<vmem>>, vector<2x128xf32>,
    return
  }
}

</mosaic_0001>

<llo_original>
// kernel: tpu_custom_call.1
$region0: #{tpu_custom_call.1}
  #allocation0 [shape = 'u32[]', space=smem, size = 0x4, offset = 0x4, fixed_abs, tag = 'smem constant byte address 0x4 - core index']
  #allocation1 [shape = 'u32[144,128]{1,0:T(1,128)}', space=vmem, size = 0x12000, scoped, tag = 'internal scratch']
  %s0 = inlined_call_operand.hbm [shape: f32[1,128], index: 0, kind: input, shape index: {}]
  %s1 = inlined_call_operand.hbm [shape: f32[2,128], index: 1, kind: output, shape index: {}]
  %s2 = sld [smem:[#allocation0]]
  $region18: #{tpu_custom_call.1} parent=0
    _
  %s4 = ssub.s32 1, %s2
  %s5 = scalar_select 0, %s4, %s2
  $region1: #{tpu_custom_call.1} parent=0
    #allocation2 [shape = 'u8[512]{0}', space=vmem, size = 0x400, scoped, tag = 'input window, operand 0, single buffered']
    #allocation3 [shape = 's32[1]{0}', space=sflag, size = 0x4, scoped, tag = 'scoped memory for tpu_custom_call.1']
    #allocation4 [shape = 's32[1]{0}', space=sflag, size = 0x4, scoped, tag = 'scoped memory for tpu_custom_call.1']
    #allocation5 [shape = 'u8[1024]{0}', space=vmem, size = 0x400, scoped, tag = 'output window, operand 0, single buffered']
    %6 = vsyncpa [#allocation3], 0
    %7 = vsyncpa [#allocation4], 0
    // Predicated region
    $region2: #{tpu_custom_call.1} parent=1 // pred_check
      _
    $region3: #{tpu_custom_call.1} parent=1 // pred_check_branch
      %9 = sbr.rel (0) target = $region5
    $region4: #{tpu_custom_call.1} parent=1 // pred_region
      %s11 = ssub.s32 16, 16
      %12 = vsyncadd [#allocation3], %s11
      %s14 = sshll.u32 [#allocation2], 4
      %s15 = int_to_ptr.vmem [resolvable:$true] %s14
      %17 = dma.hbm_to_vmem [thread:$0]  %s0, 16, %s15, [#allocation3]
    $region5: #{tpu_custom_call.1} parent=1 // pred_fallthru
      _
    // Predicated region
    $region6: #{tpu_custom_call.1} parent=1 // pred_check
      _
    $region7: #{tpu_custom_call.1} parent=1 // pred_check_branch
      %19 = sbr.rel (0) target = $region9
    $region8: #{tpu_custom_call.1} parent=1 // pred_region
      %20 = dma.done [#allocation3], 16
    $region9: #{tpu_custom_call.1} parent=1 // pred_fallthru
      _
    %v21 = vld [vmem:[#allocation2] sm:$0x1]
    %v22 = vtanh.pop %v21
    %v23 = vmax.f32 %v22, 0.0
    %v25 = vlaneseq
    %v26 = vshrl.u32 %v25, 7
    %v27 = vsub.s32 0, %v26
    %v28 = vrot.slane %v23, %v27
    %30 = vst [vmem:[#allocation5] sm:$0x3] %v28
    // Predicated region
    $region10: #{tpu_custom_call.1} parent=1 // pred_check
      _
    $region11: #{tpu_custom_call.1} parent=1 // pred_check_branch
      %32 = sbr.rel (0) target = $region13
    $region12: #{tpu_custom_call.1} parent=1 // pred_region
      %s34 = ssub.s32 32, 32
      %35 = vsyncadd [#allocation4], %s34
      %s37 = sshll.u32 [#allocation5], 4
      %s38 = int_to_ptr.vmem [resolvable:$true] %s37
      %40 = dma.vmem_to_hbm [thread:$0]  %s38, 32, %s1, [#allocation4]
    $region13: #{tpu_custom_call.1} parent=1 // pred_fallthru
      _
    // Predicated region
    $region14: #{tpu_custom_call.1} parent=1 // pred_check
      _
    $region15: #{tpu_custom_call.1} parent=1 // pred_check_branch
      %42 = sbr.rel (0) target = $region17
    $region16: #{tpu_custom_call.1} parent=1 // pred_region
      %43 = dma.done [#allocation4], 32
    $region17: #{tpu_custom_call.1} parent=1 // pred_fallthru
      _
    %44 = vsyncpa [#allocation3], 1
    %45 = vsyncpa [#allocation4], 1

</llo_original>
